<compile_context>
chip_gen: v6e
topology: v6e:2x2x1
jax: 0.10.0
libtpu: 0.0.40
codegen_flags: <defaults>
</compile_context>

<pallas_src>
import math
import functools

import jax
import jax.numpy as jnp
from jax.experimental import pallas as pl
from jax.experimental.pallas import tpu as pltpu


def _tpu_budgets():
    """Generation-aware VMEM budget and default tile sizes."""
    vmem_bytes = 64 * 1024 * 1024          # conservative fallback (v7x-class)
    try:
        vmem_bytes = int(pltpu.get_tpu_info().vmem_capacity_bytes)
    except Exception:
        pass
    if vmem_bytes <= 64 * 1024 * 1024:
        # v7x-class: 64 MiB per TensorCore -> tighter weight tiles.
        return dict(vmem_limit=52 * 1024 * 1024, proj_k_tile=512, kv_chunk=1024)
    # v5e / v6e: 128 MiB VMEM -> larger tiles amortize per-step overhead.
    return dict(vmem_limit=96 * 1024 * 1024, proj_k_tile=1024, kv_chunk=1024)


# ----------------------------------------------------------------------------
# Kernel 1: fused QKV projection + RoPE + in-place KV cache writeback.
# Grid: (dim // TK,)  -- reduction over the model dimension.
# ----------------------------------------------------------------------------
def _qkv_rope_cache_kernel(x_ref, w_ref, cos_q_ref, sin_q_ref, cos_k_ref,
                           sin_k_ref, kcache_in_ref, vcache_in_ref,
                           q_out_ref, kcache_out_ref, vcache_out_ref,
                           acc_ref, *, n_heads_q, n_kv_heads, head_dim,
                           row_in_window):
    k = pl.program_id(0)

    @pl.when(k == 0)
    def _():
        acc_ref[...] = jnp.zeros_like(acc_ref)

    # bf16 x bf16 -> f32 accumulation on the MXU.
    acc_ref[...] += jnp.dot(x_ref[...], w_ref[...],
                            preferred_element_type=jnp.float32)

    @pl.when(k == pl.num_programs(0) - 1)
    def _():
        D = head_dim
        D2 = D // 2
        nq2 = n_heads_q * D2
        nk2 = n_kv_heads * D2
        qkv = acc_ref[...]                       # f32 (B, n_total)
        B = qkv.shape[0]

        # Column sections (permuted at weight-prep time):
        #   [q_re | q_im | k_re | k_im | v].
        q_re = qkv[:, 0:nq2]
        q_im = qkv[:, nq2:2 * nq2]
        k_re = qkv[:, 2 * nq2:2 * nq2 + nk2]
        k_im = qkv[:, 2 * nq2 + nk2:2 * nq2 + 2 * nk2]
        v_sec = qkv[:, 2 * nq2 + 2 * nk2:]

        cq = cos_q_ref[...]
        sq = sin_q_ref[...]
        ck = cos_k_ref[...]
        sk = sin_k_ref[...]

        # RoPE: (re + i*im) * (cos + i*sin) — pure f32 elementwise (VPU).
        q_rot_re = q_re * cq - q_im * sq
        q_rot_im = q_re * sq + q_im * cq
        k_rot_re = k_re * ck - k_im * sk
        k_rot_im = k_re * sk + k_im * ck

        # Vectorized epilogue: one concat + one wide store per tensor.
        q3 = jnp.concatenate(
            [q_rot_re.reshape(B, n_heads_q, D2),
             q_rot_im.reshape(B, n_heads_q, D2)], axis=-1)   # (B, Hq, D)
        q_out_ref[...] = q3.astype(q_out_ref.dtype)

        k3 = jnp.concatenate(
            [k_rot_re.reshape(B, n_kv_heads, D2),
             k_rot_im.reshape(B, n_kv_heads, D2)], axis=-1)  # (B, Hkv, D)
        v3 = v_sec.reshape(B, n_kv_heads, D)                 # (B, Hkv, D)

        # Copy the aliased 8-row cache window, then overwrite the new row
        # (single full-width store each).
        kcache_out_ref[...] = kcache_in_ref[...]
        vcache_out_ref[...] = vcache_in_ref[...]
        kcache_out_ref[:, :, row_in_window, :] = k3.astype(kcache_out_ref.dtype)
        vcache_out_ref[:, :, row_in_window, :] = v3.astype(vcache_out_ref.dtype)


# ----------------------------------------------------------------------------
# Kernel 2: flash-style decode attention over the (updated) KV cache.
# Grid: (head_groups, batch, kv_chunks).  Output = per-head contexts; the wo
# projection is done outside (one big XLA matmul).
# ----------------------------------------------------------------------------
def _flash_decode_kernel(q_ref, k_ref, v_ref, o_ref,
                         m_ref, l_ref, acc_ref,
                         *, chunk, s_total, scale):
    c = pl.program_id(2)

    @pl.when(c == 0)
    def _():
        m_ref[...] = jnp.full_like(m_ref, -jnp.inf)
        l_ref[...] = jnp.zeros_like(l_ref)
        acc_ref[...] = jnp.zeros_like(acc_ref)

    q = q_ref[...]                                       # (KG, n_rep, D) bf16
    kc = k_ref[...]                                      # (KG, chunk, D) bf16
    vc = v_ref[...]                                      # (KG, chunk, D) bf16

    # Batched scores for all kv heads of this group in one contraction.
    s = jnp.einsum('gqd,gkd->gqk', q, kc,
                   preferred_element_type=jnp.float32) * scale  # (KG, n_rep, chunk)

    # Mask cache rows beyond the current sequence length (start_pos + 1).
    pos = c * chunk + jax.lax.broadcasted_iota(jnp.int32, s.shape, 2)
    s = jnp.where(pos < s_total, s, -1e30)

    # Online softmax: all updates are full-width (no partial RMW / concats).
    m_prev = m_ref[...]                                  # (KG, n_rep, 1)
    m_new = jnp.maximum(m_prev, jnp.max(s, axis=-1, keepdims=True))
    alpha = jnp.exp(m_prev - m_new)
    p = jnp.exp(s - m_new)                               # (KG, n_rep, chunk)
    l_ref[...] = alpha * l_ref[...] + jnp.sum(p, axis=-1, keepdims=True)
    pv = jnp.einsum('gqk,gkd->gqd', p.astype(vc.dtype), vc,
                    preferred_element_type=jnp.float32)  # (KG, n_rep, D)
    acc_ref[...] = alpha * acc_ref[...] + pv
    m_ref[...] = m_new

    @pl.when(c == pl.num_programs(2) - 1)
    def _():
        inv_l = pl.reciprocal(l_ref[...], approx=True)
        o_ref[...] = (acc_ref[...] * inv_l).astype(o_ref.dtype)


# ----------------------------------------------------------------------------
# Parameter preparation (done ONCE at model-load time).
# ----------------------------------------------------------------------------
def prepare_attention_weights(wq, wk, wv, wo, n_heads_q, n_kv_heads,
                              param_dtype=jnp.bfloat16):
    """Returns (w_qkv, wo_p), both cast to `param_dtype` (bf16 by default).

    w_qkv: (dim, (Hq + 2*Hkv) * D) — wq/wk columns de-interleaved per head
           into [all real | all imag] order so RoPE in the kernel is purely
           elementwise.
    wo_p:  (Hq*D, dim) — unchanged layout (the attention kernel emits contexts
           in V's original head_dim order), just cast.
    """
    dim = wq.shape[0]
    D = dim // n_heads_q
    D2 = D // 2

    def deinterleave_cols(w, n_heads):
        cols_re = (jnp.arange(n_heads)[:, None] * D
                   + 2 * jnp.arange(D2)[None, :]).reshape(-1)
        cols_im = cols_re + 1
        return jnp.concatenate([w[:, cols_re], w[:, cols_im]], axis=1)

    w_qkv = jnp.concatenate([deinterleave_cols(wq, n_heads_q),
                             deinterleave_cols(wk, n_kv_heads),
                             wv], axis=1).astype(param_dtype)
    return w_qkv, wo.astype(param_dtype)


# ----------------------------------------------------------------------------
# Forward pass.
# ----------------------------------------------------------------------------
def self_attention_forward(x, weights, cache_k, cache_v, start_pos,
                           freqs_cos, freqs_sin, n_heads_q, n_kv_heads,
                           *, kv_chunk=None, kv_head_groups=None,
                           proj_k_tile=None, compute_dtype=jnp.bfloat16):
    """x: (B, 1, dim).  Caches in the canonical bf16 head-major layout.
    Returns (out (B, 1, dim), updated cache_k, updated cache_v)."""
    w_qkv, wo_p = weights
    budget = _tpu_budgets()
    if kv_chunk is None:
        kv_chunk = budget["kv_chunk"]
    if proj_k_tile is None:
        proj_k_tile = budget["proj_k_tile"]
    vmem_limit = budget["vmem_limit"]

    B, seq_len, dim = x.shape
    assert seq_len == 1, "decode-step attention (single new token)"
    Hq, Hkv = n_heads_q, n_kv_heads
    assert Hq % Hkv == 0
    D = dim // Hq
    assert D % 2 == 0
    D2 = D // 2
    n_rep = Hq // Hkv

    max_b, hkv_c, s_max, d_c = cache_k.shape
    assert hkv_c == Hkv and d_c == D and B <= max_b and s_max % 8 == 0
    start_pos = int(start_pos)
    assert 0 <= start_pos < s_max

    G = kv_head_groups if kv_head_groups is not None else min(2, Hkv)
    assert Hkv % G == 0
    KG = Hkv // G            # kv heads per group

    # KV chunk no larger than needed for the current (static) history length,
    # while keeping s_max % chunk == 0 so every grid block stays in bounds.
    s_total = start_pos + 1
    chunk = min(kv_chunk, s_max)
    tight = max(8, 1 << (s_total - 1).bit_length())
    if tight < chunk and s_max % tight == 0:
        chunk = tight
    assert chunk % 8 == 0 and s_max % chunk == 0
    C = pl.cdiv(s_total, chunk)

    TK = min(proj_k_tile, dim)
    assert dim % TK == 0
    KT = dim // TK

    n_total = (Hq + 2 * Hkv) * D
    nq2 = Hq * D2
    nk2 = Hkv * D2

    x2d = x.reshape(B, dim).astype(compute_dtype)
    fc = freqs_cos.reshape(-1).astype(jnp.float32)
    fs = freqs_sin.reshape(-1).astype(jnp.float32)
    cos_q = jnp.tile(fc, Hq)[None, :]
    sin_q = jnp.tile(fs, Hq)[None, :]
    cos_k = jnp.tile(fc, Hkv)[None, :]
    sin_k = jnp.tile(fs, Hkv)[None, :]

    win = start_pos // 8      # 8-row aligned cache window (read-modify-write)
    row = start_pos % 8

    proj_kernel = functools.partial(
        _qkv_rope_cache_kernel, n_heads_q=Hq, n_kv_heads=Hkv, head_dim=D,
        row_in_window=row)

    q_rot, cache_k, cache_v = pl.pallas_call(
        proj_kernel,
        out_shape=(
            jax.ShapeDtypeStruct((B, Hq, D), compute_dtype),
            jax.ShapeDtypeStruct(cache_k.shape, cache_k.dtype),
            jax.ShapeDtypeStruct(cache_v.shape, cache_v.dtype),
        ),
        grid_spec=pltpu.PrefetchScalarGridSpec(
            num_scalar_prefetch=0,
            grid=(KT,),
            in_specs=[
                pl.BlockSpec((B, TK), lambda k: (0, k)),               # x
                pl.BlockSpec((TK, n_total), lambda k: (k, 0)),         # w_qkv
                pl.BlockSpec((1, nq2), lambda k: (0, 0)),              # cos_q
                pl.BlockSpec((1, nq2), lambda k: (0, 0)),              # sin_q
                pl.BlockSpec((1, nk2), lambda k: (0, 0)),              # cos_k
                pl.BlockSpec((1, nk2), lambda k: (0, 0)),              # sin_k
                pl.BlockSpec((B, Hkv, 8, D), lambda k: (0, 0, win, 0)),  # K win
                pl.BlockSpec((B, Hkv, 8, D), lambda k: (0, 0, win, 0)),  # V win
            ],
            out_specs=[
                pl.BlockSpec((B, Hq, D), lambda k: (0, 0, 0)),           # q_rot
                pl.BlockSpec((B, Hkv, 8, D), lambda k: (0, 0, win, 0)),
                pl.BlockSpec((B, Hkv, 8, D), lambda k: (0, 0, win, 0)),
            ],
            scratch_shapes=[pltpu.VMEM((B, n_total), jnp.float32)],
        ),
        input_output_aliases={6: 1, 7: 2},   # in-place KV cache writeback
        compiler_params=pltpu.CompilerParams(
            dimension_semantics=("arbitrary",),
            vmem_limit_bytes=vmem_limit),
    )(x2d, w_qkv, cos_q, sin_q, cos_k, sin_k, cache_k, cache_v)

    # ---- flash decode attention over the updated cache ----------------------
    scale = 1.0 / math.sqrt(D)
    q4 = q_rot.reshape(B, Hkv, n_rep, D)      # heads grouped by their kv head

    attn_kernel = functools.partial(
        _flash_decode_kernel, chunk=chunk, s_total=s_total, scale=scale)

    ctx = pl.pallas_call(
        attn_kernel,
        out_shape=jax.ShapeDtypeStruct((B, Hkv, n_rep, D), compute_dtype),
        grid_spec=pltpu.PrefetchScalarGridSpec(
            num_scalar_prefetch=0,
            grid=(G, B, C),
            in_specs=[
                pl.BlockSpec((None, KG, n_rep, D),
                             lambda g, b, c: (b, g, 0, 0)),            # q
                pl.BlockSpec((None, KG, chunk, D),
                             lambda g, b, c: (b, g, c, 0)),            # K cache
                pl.BlockSpec((None, KG, chunk, D),
                             lambda g, b, c: (b, g, c, 0)),            # V cache
            ],
            out_specs=pl.BlockSpec((None, KG, n_rep, D),
                                   lambda g, b, c: (b, g, 0, 0)),
            scratch_shapes=[
                pltpu.VMEM((KG, n_rep, 1), jnp.float32),   # m
                pltpu.VMEM((KG, n_rep, 1), jnp.float32),   # l
                pltpu.VMEM((KG, n_rep, D), jnp.float32),   # acc
            ],
        ),
        compiler_params=pltpu.CompilerParams(
            dimension_semantics=("parallel", "parallel", "arbitrary"),
            vmem_limit_bytes=vmem_limit),
    )(q4, cache_k, cache_v)

    # Output projection hoisted out of the kernel: one (B, Hq*D) @ (Hq*D, dim)
    # MXU matmul handled by XLA (no resident wo block in VMEM, no M=1 loops).
    ctx2 = ctx.reshape(B, Hq * D)
    out = jnp.dot(ctx2, wo_p, preferred_element_type=jnp.float32)
    out = out.astype(x.dtype).reshape(B, 1, dim)
    return out, cache_k, cache_v


# ----------------------------------------------------------------------------
# Pure-JAX transcription of the PyTorch module (for verification).
# ----------------------------------------------------------------------------
def reference_forward(x, wq, wk, wv, wo, cache_k, cache_v, start_pos,
                      freqs_cos, freqs_sin, n_heads_q, n_kv_heads):
    B, seq_len, dim = x.shape
    D = dim // n_heads_q
    n_rep = n_heads_q // n_kv_heads

    xq = (x @ wq).reshape(B, seq_len, n_heads_q, D)
    xk = (x @ wk).reshape(B, seq_len, n_kv_heads, D)
    xv = (x @ wv).reshape(B, seq_len, n_kv_heads, D)

    def rope(t):
        tr = t.reshape(*t.shape[:-1], D // 2, 2)
        re, im = tr[..., 0], tr[..., 1]
        cos = freqs_cos[None, None, None, :]
        sin = freqs_sin[None, None, None, :]
        out = jnp.stack([re * cos - im * sin, re * sin + im * cos], axis=-1)
        return out.reshape(t.shape)

    xq = rope(xq)
    xk = rope(xk)

    cache_k = cache_k.at[:B, start_pos:start_pos + 1].set(xk)
    cache_v = cache_v.at[:B, start_pos:start_pos + 1].set(xv)
    keys = jnp.repeat(cache_k[:B, :start_pos + 1], n_rep, axis=2)
    values = jnp.repeat(cache_v[:B, :start_pos + 1], n_rep, axis=2)

    xq = xq.transpose(0, 2, 1, 3)
    keys = keys.transpose(0, 2, 1, 3)
    values = values.transpose(0, 2, 1, 3)

    scores = jnp.einsum('bhqd,bhkd->bhqk', xq, keys) / math.sqrt(D)
    scores = jax.nn.softmax(scores.astype(jnp.float32), axis=-1)
    out = jnp.einsum('bhqk,bhkd->bhqd', scores, values)
    out = out.transpose(0, 2, 1, 3).reshape(B, seq_len, -1)
    return out @ wo, cache_k, cache_v


if __name__ == "__main__":
    # Small ModelArgs-consistent shapes: dim=32, n_heads=4, n_kv_heads=2 -> D=8.
    B, dim, Hq, Hkv = 2, 32, 4, 2
    D = dim // Hq
    D2 = D // 2
    max_batch, max_seq = 2, 16
    start_pos = 11           # 2 KV chunks of 8 -> exercises online softmax + masking

    key = jax.random.PRNGKey(0)
    ks = jax.random.split(key, 7)
    x = jax.random.normal(ks[0], (B, 1, dim), jnp.float32)
    # torch nn.Linear weight is (out, in); we store the transposed (in, out) form.
    wq = jax.random.normal(ks[1], (dim, Hq * D), jnp.float32) * 0.1
    wk = jax.random.normal(ks[2], (dim, Hkv * D), jnp.float32) * 0.1
    wv = jax.random.normal(ks[3], (dim, Hkv * D), jnp.float32) * 0.1
    wo = jax.random.normal(ks[4], (Hq * D, dim), jnp.float32) * 0.1
    # Module inits the cache to zeros; fill with deterministic values so the
    # history actually exercises the attention path.
    cache_k = jax.random.normal(ks[5], (max_batch, max_seq, Hkv, D), jnp.float32)
    cache_v = jax.random.normal(ks[6], (max_batch, max_seq, Hkv, D), jnp.float32)

    # Rotary frequencies for position `start_pos` (Llama convention).
    j = jnp.arange(D2, dtype=jnp.float32)
    theta = 1.0 / (10000.0 ** (2.0 * j / D))
    freqs_cos = jnp.cos(start_pos * theta)
    freqs_sin = jnp.sin(start_pos * theta)

    # One-time parameter prep (bf16) + conversion of the (test-only, externally
    # prefilled) caches into the canonical bf16 Pallas layout described above.
    params = prepare_attention_weights(wq, wk, wv, wo, Hq, Hkv)
    deint = jnp.concatenate([jnp.arange(0, D, 2), jnp.arange(1, D, 2)])
    cache_k_p = jnp.transpose(cache_k, (0, 2, 1, 3))[..., deint].astype(jnp.bfloat16)
    cache_v_p = jnp.transpose(cache_v, (0, 2, 1, 3)).astype(jnp.bfloat16)

    out, new_ck, new_cv = self_attention_forward(
        x, params, cache_k_p, cache_v_p, start_pos, freqs_cos, freqs_sin,
        Hq, Hkv, kv_chunk=8, kv_head_groups=2, proj_k_tile=32)
    out = jax.block_until_ready(out)

    ref_out, ref_ck, ref_cv = reference_forward(
        x, wq, wk, wv, wo, cache_k, cache_v, start_pos,
        freqs_cos, freqs_sin, Hq, Hkv)

    assert out.shape == (B, 1, dim)
    err = float(jnp.max(jnp.abs(out - ref_out)))
    # bf16 weights/cache vs f32 reference -> loosened tolerance.
    assert jnp.allclose(out, ref_out, atol=3e-2, rtol=3e-2), err

    # In-kernel KV-cache writeback at row `start_pos` must match the module.
    ref_k_row = ref_ck[:B, start_pos][..., deint]     # (B, Hkv, D), canonical layout
    ref_v_row = ref_cv[:B, start_pos]
    assert jnp.allclose(new_ck[:B, :, start_pos, :].astype(jnp.float32),
                        ref_k_row, atol=2e-2, rtol=2e-2)
    assert jnp.allclose(new_cv[:B, :, start_pos, :].astype(jnp.float32),
                        ref_v_row, atol=2e-2, rtol=2e-2)

    # start_pos == 0 (first decode step, empty history).
    fc0 = jnp.ones((D2,), jnp.float32)
    fs0 = jnp.zeros((D2,), jnp.float32)
    ck0 = jnp.transpose(cache_k, (0, 2, 1, 3))[..., deint].astype(jnp.bfloat16)
    cv0 = jnp.transpose(cache_v, (0, 2, 1, 3)).astype(jnp.bfloat16)
    out0, _, _ = self_attention_forward(
        x, params, ck0, cv0, 0, fc0, fs0, Hq, Hkv,
        kv_chunk=8, kv_head_groups=2, proj_k_tile=32)
    out0 = jax.block_until_ready(out0)
    ref0, _, _ = reference_forward(x, wq, wk, wv, wo, cache_k, cache_v, 0,
                                   fc0, fs0, Hq, Hkv)
    assert jnp.allclose(out0, ref0, atol=3e-2, rtol=3e-2)

    print("KERNEL_OK")
</pallas_src>

<mosaic_0001>
module attributes {stable_mosaic.version = 11 : i64} {
  func.func @_qkv_rope_cache_kernel(%arg0: i32, %arg1: memref<2x32xbf16, #tpu.memory_space<vmem>>, %arg2: memref<32x64xbf16, #tpu.memory_space<vmem>>, %arg3: memref<1x16xf32, #tpu.memory_space<vmem>>, %arg4: memref<1x16xf32, #tpu.memory_space<vmem>>, %arg5: memref<1x8xf32, #tpu.memory_space<vmem>>, %arg6: memref<1x8xf32, #tpu.memory_space<vmem>>, %arg7: memref<2x2x8x8xbf16, #tpu.memory_space<vmem>>, %arg8: memref<2x2x8x8xbf16, #tpu.memory_space<vmem>>, %arg9: memref<2x4x8xbf16, #tpu.memory_space<vmem>>, %arg10: memref<2x2x8x8xbf16, #tpu.memory_space<vmem>>, %arg11: memref<2x2x8x8xbf16, #tpu.memory_space<vmem>>, %arg12: memref<2x64xf32, #tpu.memory_space<vmem>>) attributes {dimension_semantics = [#tpu.dimension_semantics<arbitrary>], iteration_bounds = array<i64: 1>, scalar_prefetch = 0 : i64, scratch_operands = 1 : i64, tpu.core_type = #tpu.core_type<tc>, window_params = [{transform_indices = @transform_0, window_bounds = array<i64: 2, 32>}, {transform_indices = @transform_1, window_bounds = array<i64: 32, 64>}, {pipeline_mode = #tpu.pipeline_mode<synchronous>, transform_indices = @transform_2, window_bounds = array<i64: 1, 16>}, {pipeline_mode = #tpu.pipeline_mode<synchronous>, transform_indices = @transform_3, window_bounds = array<i64: 1, 16>}, {pipeline_mode = #tpu.pipeline_mode<synchronous>, transform_indices = @transform_4, window_bounds = array<i64: 1, 8>}, {pipeline_mode = #tpu.pipeline_mode<synchronous>, transform_indices = @transform_5, window_bounds = array<i64: 1, 8>}, {transform_indices = @transform_6, window_bounds = array<i64: 2, 2, 8, 8>}, {transform_indices = @transform_7, window_bounds = array<i64: 2, 2, 8, 8>}, {pipeline_mode = #tpu.pipeline_mode<synchronous>, transform_indices = @transform_8, window_bounds = array<i64: 2, 4, 8>}, {transform_indices = @transform_9, window_bounds = array<i64: 2, 2, 8, 8>}, {transform_indices = @transform_10, window_bounds = array<i64: 2, 2, 8, 8>}]} {
    %c0_i32 = arith.constant 0 : i32
    %0 = arith.cmpi eq, %arg0, %c0_i32 : i32
    %1 = arith.extui %0 : i1 to i32
    %c0_i32_0 = arith.constant 0 : i32
    %2 = arith.cmpi ne, %1, %c0_i32_0 : i32
    scf.if %2 {
      %cst_10 = arith.constant 0.000000e+00 : f32
      %12 = vector.broadcast %cst_10 : f32 to vector<2x64xf32>
      %c0_11 = arith.constant 0 : index
      %c0_12 = arith.constant 0 : index
      %13 = vector.load %arg12[%c0_11, %c0_12] : memref<2x64xf32, #tpu.memory_space<vmem>>, vector<2x64xf32>
      tpu.vector_store %arg12[%c0_11, %c0_12], %12 {strides = array<i32>} : memref<2x64xf32, #tpu.memory_space<vmem>>, vector<2x64xf32>,
    } else {
    }
    %c0 = arith.constant 0 : index
    %c0_1 = arith.constant 0 : index
    %3 = vector.load %arg12[%c0, %c0_1] : memref<2x64xf32, #tpu.memory_space<vmem>>, vector<2x64xf32>
    %c0_2 = arith.constant 0 : index
    %c0_3 = arith.constant 0 : index
    %4 = vector.load %arg1[%c0_2, %c0_3] : memref<2x32xbf16, #tpu.memory_space<vmem>>, vector<2x32xbf16>
    %c0_4 = arith.constant 0 : index
    %c0_5 = arith.constant 0 : index
    %5 = vector.load %arg2[%c0_4, %c0_5] : memref<32x64xbf16, #tpu.memory_space<vmem>>, vector<32x64xbf16>
    %cst = arith.constant dense<0.000000e+00> : vector<2x64xf32>
    %6 = tpu.matmul %4, %5, %cst {dimension_numbers = #tpu.dot_dimension_numbers<[1], [0], [0], [1], [0, 0, 1, 1], [], []>} : vector<2x32xbf16>, vector<32x64xbf16>, vector<2x64xf32> -> vector<2x64xf32>
    %7 = arith.addf %3, %6 : vector<2x64xf32>
    %c0_6 = arith.constant 0 : index
    %c0_7 = arith.constant 0 : index
    %8 = vector.load %arg12[%c0_6, %c0_7] : memref<2x64xf32, #tpu.memory_space<vmem>>, vector<2x64xf32>
    tpu.vector_store %arg12[%c0_6, %c0_7], %7 {strides = array<i32>} : memref<2x64xf32, #tpu.memory_space<vmem>>, vector<2x64xf32>,
    %c0_i32_8 = arith.constant 0 : i32
    %9 = arith.cmpi eq, %arg0, %c0_i32_8 : i32
    %10 = arith.extui %9 : i1 to i32
    %c0_i32_9 = arith.constant 0 : i32
    %11 = arith.cmpi ne, %10, %c0_i32_9 : i32
    scf.if %11 {
      %c0_10 = arith.constant 0 : index
      %c0_11 = arith.constant 0 : index
      %12 = vector.load %arg12[%c0_10, %c0_11] : memref<2x64xf32, #tpu.memory_space<vmem>>, vector<2x64xf32>
      %13 = vector.extract_strided_slice %12 {offsets = [0, 0], sizes = [2, 16], strides = [1, 1]} : vector<2x64xf32> to vector<2x16xf32>
      %14 = vector.extract_strided_slice %12 {offsets = [0, 16], sizes = [2, 16], strides = [1, 1]} : vector<2x64xf32> to vector<2x16xf32>
      %15 = vector.extract_strided_slice %12 {offsets = [0, 32], sizes = [2, 8], strides = [1, 1]} : vector<2x64xf32> to vector<2x8xf32>
      %16 = vector.extract_strided_slice %12 {offsets = [0, 40], sizes = [2, 8], strides = [1, 1]} : vector<2x64xf32> to vector<2x8xf32>
      %17 = vector.extract_strided_slice %12 {offsets = [0, 48], sizes = [2, 16], strides = [1, 1]} : vector<2x64xf32> to vector<2x16xf32>
      %c0_12 = arith.constant 0 : index
      %c0_13 = arith.constant 0 : index
      %18 = vector.load %arg3[%c0_12, %c0_13] : memref<1x16xf32, #tpu.memory_space<vmem>>, vector<1x16xf32>
      %c0_14 = arith.constant 0 : index
      %c0_15 = arith.constant 0 : index
      %19 = vector.load %arg4[%c0_14, %c0_15] : memref<1x16xf32, #tpu.memory_space<vmem>>, vector<1x16xf32>
      %c0_16 = arith.constant 0 : index
      %c0_17 = arith.constant 0 : index
      %20 = vector.load %arg5[%c0_16, %c0_17] : memref<1x8xf32, #tpu.memory_space<vmem>>, vector<1x8xf32>
      %c0_18 = arith.constant 0 : index
      %c0_19 = arith.constant 0 : index
      %21 = vector.load %arg6[%c0_18, %c0_19] : memref<1x8xf32, #tpu.memory_space<vmem>>, vector<1x8xf32>
      %22 = vector.broadcast %18 : vector<1x16xf32> to vector<2x16xf32>
      %23 = arith.mulf %13, %22 : vector<2x16xf32>
      %24 = vector.broadcast %19 : vector<1x16xf32> to vector<2x16xf32>
      %25 = arith.mulf %14, %24 : vector<2x16xf32>
      %26 = arith.subf %23, %25 : vector<2x16xf32>
      %27 = vector.broadcast %19 : vector<1x16xf32> to vector<2x16xf32>
      %28 = arith.mulf %13, %27 : vector<2x16xf32>
      %29 = vector.broadcast %18 : vector<1x16xf32> to vector<2x16xf32>
      %30 = arith.mulf %14, %29 : vector<2x16xf32>
      %31 = arith.addf %28, %30 : vector<2x16xf32>
      %32 = vector.broadcast %20 : vector<1x8xf32> to vector<2x8xf32>
      %33 = arith.mulf %15, %32 : vector<2x8xf32>
      %34 = vector.broadcast %21 : vector<1x8xf32> to vector<2x8xf32>
      %35 = arith.mulf %16, %34 : vector<2x8xf32>
      %36 = arith.subf %33, %35 : vector<2x8xf32>
      %37 = vector.broadcast %21 : vector<1x8xf32> to vector<2x8xf32>
      %38 = arith.mulf %15, %37 : vector<2x8xf32>
      %39 = vector.broadcast %20 : vector<1x8xf32> to vector<2x8xf32>
      %40 = arith.mulf %16, %39 : vector<2x8xf32>
      %41 = arith.addf %38, %40 : vector<2x8xf32>
      %42 = vector.shape_cast %26 : vector<2x16xf32> to vector<2x4x4xf32>
      %43 = vector.shape_cast %31 : vector<2x16xf32> to vector<2x4x4xf32>
      %44 = tpu.concatenate %42, %43 in 2 : vector<2x4x4xf32>, vector<2x4x4xf32> -> vector<2x4x8xf32>
      %45 = arith.truncf %44 : vector<2x4x8xf32> to vector<2x4x8xbf16>
      %c0_20 = arith.constant 0 : index
      %c0_21 = arith.constant 0 : index
      %c0_22 = arith.constant 0 : index
      %46 = vector.load %arg9[%c0_20, %c0_21, %c0_22] : memref<2x4x8xbf16, #tpu.memory_space<vmem>>, vector<2x4x8xbf16>
      tpu.vector_store %arg9[%c0_20, %c0_21, %c0_22], %45 {strides = array<i32>} : memref<2x4x8xbf16, #tpu.memory_space<vmem>>, vector<2x4x8xbf16>,
      %47 = vector.shape_cast %36 : vector<2x8xf32> to vector<2x2x4xf32>
      %48 = vector.shape_cast %41 : vector<2x8xf32> to vector<2x2x4xf32>
      %49 = tpu.concatenate %47, %48 in 2 : vector<2x2x4xf32>, vector<2x2x4xf32> -> vector<2x2x8xf32>
      %50 = vector.shape_cast %17 : vector<2x16xf32> to vector<2x2x8xf32>
      %c0_23 = arith.constant 0 : index
      %c0_24 = arith.constant 0 : index
      %c0_25 = arith.constant 0 : index
      %c0_26 = arith.constant 0 : index
      %51 = vector.load %arg7[%c0_23, %c0_24, %c0_25, %c0_26] : memref<2x2x8x8xbf16, #tpu.memory_space<vmem>>, vector<2x2x8x8xbf16>
      %c0_27 = arith.constant 0 : index
      %c0_28 = arith.constant 0 : index
      %c0_29 = arith.constant 0 : index
      %c0_30 = arith.constant 0 : index
      %52 = vector.load %arg10[%c0_27, %c0_28, %c0_29, %c0_30] : memref<2x2x8x8xbf16, #tpu.memory_space<vmem>>, vector<2x2x8x8xbf16>
      tpu.vector_store %arg10[%c0_27, %c0_28, %c0_29, %c0_30], %51 {strides = array<i32>} : memref<2x2x8x8xbf16, #tpu.memory_space<vmem>>, vector<2x2x8x8xbf16>,
      %c0_31 = arith.constant 0 : index
      %c0_32 = arith.constant 0 : index
      %c0_33 = arith.constant 0 : index
      %c0_34 = arith.constant 0 : index
      %53 = vector.load %arg8[%c0_31, %c0_32, %c0_33, %c0_34] : memref<2x2x8x8xbf16, #tpu.memory_space<vmem>>, vector<2x2x8x8xbf16>
      %c0_35 = arith.constant 0 : index
      %c0_36 = arith.constant 0 : index
      %c0_37 = arith.constant 0 : index
      %c0_38 = arith.constant 0 : index
      %54 = vector.load %arg11[%c0_35, %c0_36, %c0_37, %c0_38] : memref<2x2x8x8xbf16, #tpu.memory_space<vmem>>, vector<2x2x8x8xbf16>
      tpu.vector_store %arg11[%c0_35, %c0_36, %c0_37, %c0_38], %53 {strides = array<i32>} : memref<2x2x8x8xbf16, #tpu.memory_space<vmem>>, vector<2x2x8x8xbf16>,
      %55 = arith.truncf %49 : vector<2x2x8xf32> to vector<2x2x8xbf16>
      %c0_39 = arith.constant 0 : index
      %c0_40 = arith.constant 0 : index
      %c3 = arith.constant 3 : index
      %c0_41 = arith.constant 0 : index
      %56 = vector.load %arg10[%c0_39, %c0_40, %c3, %c0_41] : memref<2x2x8x8xbf16, #tpu.memory_space<vmem>>, vector<2x2x1x8xbf16>
      %57 = vector.shape_cast %56 : vector<2x2x1x8xbf16> to vector<2x2x8xbf16>
      %58 = vector.shape_cast %55 : vector<2x2x8xbf16> to vector<2x2x1x8xbf16>
      tpu.vector_store %arg10[%c0_39, %c0_40, %c3, %c0_41], %58 {strides = array<i32>} : memref<2x2x8x8xbf16, #tpu.memory_space<vmem>>, vector<2x2x1x8xbf16>,
      %59 = arith.truncf %50 : vector<2x2x8xf32> to vector<2x2x8xbf16>
      %c0_42 = arith.constant 0 : index
      %c0_43 = arith.constant 0 : index
      %c3_44 = arith.constant 3 : index
      %c0_45 = arith.constant 0 : index
      %60 = vector.load %arg11[%c0_42, %c0_43, %c3_44, %c0_45] : memref<2x2x8x8xbf16, #tpu.memory_space<vmem>>, vector<2x2x1x8xbf16>
      %61 = vector.shape_cast %60 : vector<2x2x1x8xbf16> to vector<2x2x8xbf16>
      %62 = vector.shape_cast %59 : vector<2x2x8xbf16> to vector<2x2x1x8xbf16>
      tpu.vector_store %arg11[%c0_42, %c0_43, %c3_44, %c0_45], %62 {strides = array<i32>} : memref<2x2x8x8xbf16, #tpu.memory_space<vmem>>, vector<2x2x1x8xbf16>,
    } else {
    }
    return
  }
  func.func @transform_0(%arg0: i32) -> (i32, i32) {
    %c0_i32 = arith.constant 0 : i32
    %c0_i32_0 = arith.constant 0 : i32
    return %c0_i32, %arg0 : i32, i32
  }
  func.func @transform_1(%arg0: i32) -> (i32, i32) {
    %c0_i32 = arith.constant 0 : i32
    %c0_i32_0 = arith.constant 0 : i32
    return %arg0, %c0_i32 : i32, i32
  }
  func.func @transform_2(%arg0: i32) -> (i32, i32) {
    %c0_i32 = arith.constant 0 : i32
    %c0_i32_0 = arith.constant 0 : i32
    %c0_i32_1 = arith.constant 0 : i32
    return %c0_i32, %c0_i32_0 : i32, i32
  }
  func.func @transform_3(%arg0: i32) -> (i32, i32) {
    %c0_i32 = arith.constant 0 : i32
    %c0_i32_0 = arith.constant 0 : i32
    %c0_i32_1 = arith.constant 0 : i32
    return %c0_i32, %c0_i32_0 : i32, i32
  }
  func.func @transform_4(%arg0: i32) -> (i32, i32) {
    %c0_i32 = arith.constant 0 : i32
    %c0_i32_0 = arith.constant 0 : i32
    %c0_i32_1 = arith.constant 0 : i32
    return %c0_i32, %c0_i32_0 : i32, i32
  }
  func.func @transform_5(%arg0: i32) -> (i32, i32) {
    %c0_i32 = arith.constant 0 : i32
    %c0_i32_0 = arith.constant 0 : i32
    %c0_i32_1 = arith.constant 0 : i32
    return %c0_i32, %c0_i32_0 : i32, i32
  }
  func.func @transform_6(%arg0: i32) -> (i32, i32, i32, i32) {
    %c0_i32 = arith.constant 0 : i32
    %c0_i32_0 = arith.constant 0 : i32
    %c1_i32 = arith.constant 1 : i32
    %c0_i32_1 = arith.constant 0 : i32
    %c0_i32_2 = arith.constant 0 : i32
    return %c0_i32, %c0_i32_0, %c1_i32, %c0_i32_1 : i32, i32, i32, i32
  }
  func.func @transform_7(%arg0: i32) -> (i32, i32, i32, i32) {
    %c0_i32 = arith.constant 0 : i32
    %c0_i32_0 = arith.constant 0 : i32
    %c1_i32 = arith.constant 1 : i32
    %c0_i32_1 = arith.constant 0 : i32
    %c0_i32_2 = arith.constant 0 : i32
    return %c0_i32, %c0_i32_0, %c1_i32, %c0_i32_1 : i32, i32, i32, i32
  }
  func.func @transform_8(%arg0: i32) -> (i32, i32, i32) {
    %c0_i32 = arith.constant 0 : i32
    %c0_i32_0 = arith.constant 0 : i32
    %c0_i32_1 = arith.constant 0 : i32
    %c0_i32_2 = arith.constant 0 : i32
    return %c0_i32, %c0_i32_0, %c0_i32_1 : i32, i32, i32
  }
  func.func @transform_9(%arg0: i32) -> (i32, i32, i32, i32) {
    %c0_i32 = arith.constant 0 : i32
    %c0_i32_0 = arith.constant 0 : i32
    %c1_i32 = arith.constant 1 : i32
    %c0_i32_1 = arith.constant 0 : i32
    %c0_i32_2 = arith.constant 0 : i32
    return %c0_i32, %c0_i32_0, %c1_i32, %c0_i32_1 : i32, i32, i32, i32
  }
  func.func @transform_10(%arg0: i32) -> (i32, i32, i32, i32) {
    %c0_i32 = arith.constant 0 : i32
    %c0_i32_0 = arith.constant 0 : i32
    %c1_i32 = arith.constant 1 : i32
    %c0_i32_1 = arith.constant 0 : i32
    %c0_i32_2 = arith.constant 0 : i32
    return %c0_i32, %c0_i32_0, %c1_i32, %c0_i32_1 : i32, i32, i32, i32
  }
}

</mosaic_0001>

<llo_original>
// kernel: tpu_custom_call.1
$region0: #{tpu_custom_call.1}
  #allocation0 [shape = 'u32[]', space=smem, size = 0x4, offset = 0x4, fixed_abs, tag = 'smem constant byte address 0x4 - core index']
  #allocation1 [shape = 'u32[144,128]{1,0:T(1,128)}', space=vmem, size = 0x12000, scoped, tag = 'internal scratch']
  #allocation2 [shape = 'f32[2,64]{1,0:T(2,128)}', space=vmem, size = 0x400, scoped, tag = 'scratch operand']
  %s0 = inlined_call_operand.vmem [shape: bf16[2,32], index: 0, kind: input, shape index: {}]
  %s1 = inlined_call_operand.vmem [shape: bf16[32,64], index: 1, kind: input, shape index: {}]
  %s2 = inlined_call_operand.vmem [shape: f32[1,16], index: 2, kind: input, shape index: {}]
  %s3 = inlined_call_operand.vmem [shape: f32[1,16], index: 3, kind: input, shape index: {}]
  %s4 = inlined_call_operand.vmem [shape: f32[1,8], index: 4, kind: input, shape index: {}]
  %s5 = inlined_call_operand.vmem [shape: f32[1,8], index: 5, kind: input, shape index: {}]
  %s6 = inlined_call_operand.vmem [shape: bf16[2,2,16,8], index: 6, kind: input, shape index: {}, may-alias: {6,9}]
  %s7 = inlined_call_operand.vmem [shape: bf16[2,2,16,8], index: 7, kind: input, shape index: {}, may-alias: {7,10}]
  %s8 = inlined_call_operand.hbm [shape: bf16[2,4,8], index: 8, kind: output, shape index: {0}]
  %s9 = inlined_call_operand.vmem [shape: bf16[2,2,16,8], index: 9, kind: output, shape index: {1}, may-alias: {6,9}]
  %s10 = inlined_call_operand.vmem [shape: bf16[2,2,16,8], index: 10, kind: output, shape index: {2}, may-alias: {7,10}]
  %11 = xla_tuple %s8, %s9, %s10
  %s12 = sld [smem:[#allocation0]]
  $region222: #{tpu_custom_call.1} parent=0
    _
  %s14 = ssub.s32 1, %s12
  %s15 = scalar_select 0, %s14, %s12
  $region1: #{tpu_custom_call.1} parent=0
    #allocation3 [shape = 'u8[8192]{0}', space=vmem, size = 0x2000, scoped, tag = 'input window, operand 6, single buffered']
    #allocation4 [shape = 'u8[8192]{0}', space=vmem, size = 0x2000, scoped, tag = 'input window, operand 7, single buffered']
    #allocation5 [shape = 'u8[2048]{0}', space=vmem, size = 0x800, scoped, tag = 'output window, operand 0, single buffered']
    #allocation6 [shape = 's32[1]{0}', space=sflag, size = 0x4, scoped, tag = 'scoped memory for tpu_custom_call.1']
    #allocation7 [shape = 'u8[8192]{0}', space=vmem, size = 0x2000, scoped, tag = 'output window, operand 1, single buffered']
    #allocation8 [shape = 'u8[8192]{0}', space=vmem, size = 0x2000, scoped, tag = 'output window, operand 2, single buffered']
    %16 = vsyncpa [#allocation6], 0
    // Predicated region
    $region2: #{tpu_custom_call.1} parent=1 // pred_check
      _
    $region3: #{tpu_custom_call.1} parent=1 // pred_check_branch
      %18 = sbr.rel (0) target = $region5
    $region4: #{tpu_custom_call.1} parent=1 // pred_region
      _
    $region5: #{tpu_custom_call.1} parent=1 // pred_fallthru
      _
    // Predicated region
    $region6: #{tpu_custom_call.1} parent=1 // pred_check
      _
    $region7: #{tpu_custom_call.1} parent=1 // pred_check_branch
      %20 = sbr.rel (0) target = $region9
    $region8: #{tpu_custom_call.1} parent=1 // pred_region
      _
    $region9: #{tpu_custom_call.1} parent=1 // pred_fallthru
      _
    // Predicated region
    $region10: #{tpu_custom_call.1} parent=1 // pred_check
      _
    $region11: #{tpu_custom_call.1} parent=1 // pred_check_branch
      %22 = sbr.rel (0) target = $region13
    $region12: #{tpu_custom_call.1} parent=1 // pred_region
      _
    $region13: #{tpu_custom_call.1} parent=1 // pred_fallthru
      _
    // Predicated region
    $region14: #{tpu_custom_call.1} parent=1 // pred_check
      _
    $region15: #{tpu_custom_call.1} parent=1 // pred_check_branch
      %24 = sbr.rel (0) target = $region17
    $region16: #{tpu_custom_call.1} parent=1 // pred_region
      _
    $region17: #{tpu_custom_call.1} parent=1 // pred_fallthru
      _
    // Predicated region
    $region18: #{tpu_custom_call.1} parent=1 // pred_check
      _
    $region19: #{tpu_custom_call.1} parent=1 // pred_check_branch
      %26 = sbr.rel (0) target = $region21
    $region20: #{tpu_custom_call.1} parent=1 // pred_region
      _
    $region21: #{tpu_custom_call.1} parent=1 // pred_fallthru
      _
    // Predicated region
    $region22: #{tpu_custom_call.1} parent=1 // pred_check
      _
    $region23: #{tpu_custom_call.1} parent=1 // pred_check_branch
      %28 = sbr.rel (0) target = $region25
    $region24: #{tpu_custom_call.1} parent=1 // pred_region
      _
    $region25: #{tpu_custom_call.1} parent=1 // pred_fallthru
      _
    // Predicated region
    $region26: #{tpu_custom_call.1} parent=1 // pred_check
      _
    $region27: #{tpu_custom_call.1} parent=1 // pred_check_branch
      %30 = sbr.rel (0) target = $region29
    $region28: #{tpu_custom_call.1} parent=1 // pred_region
      %s31 = scalar_lea.vmem %s6, 4
      // Predicated region
      $region30: #{tpu_custom_call.1} parent=28 // pred_check
        _
      $region31: #{tpu_custom_call.1} parent=28 // pred_check_branch
        %33 = sbr.rel (0) target = $region33
      $region32: #{tpu_custom_call.1} parent=28 // pred_region
        // Predicated region
        $region34: #{tpu_custom_call.1} parent=32 // pred_check
          _
        $region35: #{tpu_custom_call.1} parent=32 // pred_check_branch
          %35 = sbr.rel target = $region37
        $region36: #{tpu_custom_call.1} parent=32 // pred_region
          // Predicated region
          $region49: #{tpu_custom_call.1} parent=36 // pred_check
            _
          $region50: #{tpu_custom_call.1} parent=36 // pred_check_branch
            %57 = sbr.rel (0) target = $region52
          $region51: #{tpu_custom_call.1} parent=36 // pred_region
            loop: start=0, step=1, limit=1
            $region53: #{tpu_custom_call.1} parent=51 // loop_pre_header
              _
            $region54: #{tpu_custom_call.1} parent=51 // loop_header
              %s59 = sphi 0, %s63
              %p60 = scmp.ge.s32.totalorder %s59, 1
              %s64 = sphi %s31, %s31
              %s65 = sphi [#allocation3], [#allocation3]
            $region55: #{tpu_custom_call.1} parent=51 // loop_header_branch
              %62 = sbr.rel (%p60) target = $region59
            $region56: #{tpu_custom_call.1} parent=51 // loop_body
              _
            $region57: #{tpu_custom_call.1} parent=51 // loop_footer
              %s63 = sadd.s32 1, %s59
            $region58: #{tpu_custom_call.1} parent=51 // loop_footer_branch
              %58 = sbr.rel target = $region54
            $region59: #{tpu_custom_call.1} parent=51 // loop_exit
              _
            %s67 = ssub.s32 16, 1
            loop: start=0, step=1, limit=1
            $region60: #{tpu_custom_call.1} parent=51 // loop_pre_header
              _
            $region61: #{tpu_custom_call.1} parent=51 // loop_header
              %s69 = sphi 0, %s73
              %p70 = scmp.ge.s32.totalorder %s69, 1
              %s74 = sphi %s31, %s31
              %s75 = sphi [#allocation3], [#allocation3]
            $region62: #{tpu_custom_call.1} parent=51 // loop_header_branch
              %72 = sbr.rel (%p70) target = $region66
            $region63: #{tpu_custom_call.1} parent=51 // loop_body
              %v76 = vld [vmem:[%s74] sm:%s67]
              %77 = vst [vmem:[%s75] sm:%s67] %v76
              %v78 = vld [vmem:[%s74 + $0x8] sm:%s67]
              %79 = vst [vmem:[%s75 + $0x4] sm:%s67] %v78
              %v80 = vld [vmem:[%s74 + $0x10] sm:%s67]
              %81 = vst [vmem:[%s75 + $0x8] sm:%s67] %v80
              %v82 = vld [vmem:[%s74 + $0x18] sm:%s67]
              %83 = vst [vmem:[%s75 + $0xc] sm:%s67] %v82
            $region64: #{tpu_custom_call.1} parent=51 // loop_footer
              %s73 = sadd.s32 1, %s69
            $region65: #{tpu_custom_call.1} parent=51 // loop_footer_branch
              %68 = sbr.rel target = $region61
            $region66: #{tpu_custom_call.1} parent=51 // loop_exit
              _
          $region52: #{tpu_custom_call.1} parent=36 // pred_fallthru
            _
        $region37: #{tpu_custom_call.1} parent=32 // pred_fallthru
          _
        // Predicated region
        $region38: #{tpu_custom_call.1} parent=32 // pred_check
          _
        $region39: #{tpu_custom_call.1} parent=32 // pred_check_branch
          %37 = sbr.rel (0) target = $region41
        $region40: #{tpu_custom_call.1} parent=32 // pred_region
          %s39 = ssub.s32 16, 1
          loop: start=0, step=1, limit=1
          $region42: #{tpu_custom_call.1} parent=40 // loop_pre_header
            _
          $region43: #{tpu_custom_call.1} parent=40 // loop_header
            %s41 = sphi 0, %s45
            %p42 = scmp.ge.s32.totalorder %s41, 1
            %s46 = sphi %s31, %s31
            %s47 = sphi [#allocation3], [#allocation3]
          $region44: #{tpu_custom_call.1} parent=40 // loop_header_branch
            %44 = sbr.rel (%p42) target = $region48
          $region45: #{tpu_custom_call.1} parent=40 // loop_body
            %v48 = vld [vmem:[%s46] sm:%s39]
            %49 = vst [vmem:[%s47] sm:%s39] %v48
            %v50 = vld [vmem:[%s46 + $0x8] sm:%s39]
            %51 = vst [vmem:[%s47 + $0x4] sm:%s39] %v50
            %v52 = vld [vmem:[%s46 + $0x10] sm:%s39]
            %53 = vst [vmem:[%s47 + $0x8] sm:%s39] %v52
            %v54 = vld [vmem:[%s46 + $0x18] sm:%s39]
            %55 = vst [vmem:[%s47 + $0xc] sm:%s39] %v54
          $region46: #{tpu_custom_call.1} parent=40 // loop_footer
            %s45 = sadd.s32 1, %s41
          $region47: #{tpu_custom_call.1} parent=40 // loop_footer_branch
            %40 = sbr.rel target = $region43
          $region48: #{tpu_custom_call.1} parent=40 // loop_exit
            _
        $region41: #{tpu_custom_call.1} parent=32 // pred_fallthru
          _
      $region33: #{tpu_custom_call.1} parent=28 // pred_fallthru
        _
      %84 = vnop
    $region29: #{tpu_custom_call.1} parent=1 // pred_fallthru
      _
    // Predicated region
    $region67: #{tpu_custom_call.1} parent=1 // pred_check
      _
    $region68: #{tpu_custom_call.1} parent=1 // pred_check_branch
      %86 = sbr.rel (0) target = $region70
    $region69: #{tpu_custom_call.1} parent=1 // pred_region
      %s87 = scalar_lea.vmem %s7, 4
      // Predicated region
      $region71: #{tpu_custom_call.1} parent=69 // pred_check
        _
      $region72: #{tpu_custom_call.1} parent=69 // pred_check_branch
        %89 = sbr.rel (0) target = $region74
      $region73: #{tpu_custom_call.1} parent=69 // pred_region
        // Predicated region
        $region75: #{tpu_custom_call.1} parent=73 // pred_check
          _
        $region76: #{tpu_custom_call.1} parent=73 // pred_check_branch
          %91 = sbr.rel target = $region78
        $region77: #{tpu_custom_call.1} parent=73 // pred_region
          // Predicated region
          $region90: #{tpu_custom_call.1} parent=77 // pred_check
            _
          $region91: #{tpu_custom_call.1} parent=77 // pred_check_branch
            %113 = sbr.rel (0) target = $region93
          $region92: #{tpu_custom_call.1} parent=77 // pred_region
            loop: start=0, step=1, limit=1
            $region94: #{tpu_custom_call.1} parent=92 // loop_pre_header
              _
            $region95: #{tpu_custom_call.1} parent=92 // loop_header
              %s115 = sphi 0, %s119
              %p116 = scmp.ge.s32.totalorder %s115, 1
              %s120 = sphi %s87, %s87
              %s121 = sphi [#allocation4], [#allocation4]
            $region96: #{tpu_custom_call.1} parent=92 // loop_header_branch
              %118 = sbr.rel (%p116) target = $region100
            $region97: #{tpu_custom_call.1} parent=92 // loop_body
              _
            $region98: #{tpu_custom_call.1} parent=92 // loop_footer
              %s119 = sadd.s32 1, %s115
            $region99: #{tpu_custom_call.1} parent=92 // loop_footer_branch
              %114 = sbr.rel target = $region95
            $region100: #{tpu_custom_call.1} parent=92 // loop_exit
              _
            %s123 = ssub.s32 16, 1
            loop: start=0, step=1, limit=1
            $region101: #{tpu_custom_call.1} parent=92 // loop_pre_header
              _
            $region102: #{tpu_custom_call.1} parent=92 // loop_header
              %s125 = sphi 0, %s129
              %p126 = scmp.ge.s32.totalorder %s125, 1
              %s130 = sphi %s87, %s87
              %s131 = sphi [#allocation4], [#allocation4]
            $region103: #{tpu_custom_call.1} parent=92 // loop_header_branch
              %128 = sbr.rel (%p126) target = $region107
            $region104: #{tpu_custom_call.1} parent=92 // loop_body
              %v132 = vld [vmem:[%s130] sm:%s123]
              %133 = vst [vmem:[%s131] sm:%s123] %v132
              %v134 = vld [vmem:[%s130 + $0x8] sm:%s123]
              %135 = vst [vmem:[%s131 + $0x4] sm:%s123] %v134
              %v136 = vld [vmem:[%s130 + $0x10] sm:%s123]
              %137 = vst [vmem:[%s131 + $0x8] sm:%s123] %v136
              %v138 = vld [vmem:[%s130 + $0x18] sm:%s123]
              %139 = vst [vmem:[%s131 + $0xc] sm:%s123] %v138
            $region105: #{tpu_custom_call.1} parent=92 // loop_footer
              %s129 = sadd.s32 1, %s125
            $region106: #{tpu_custom_call.1} parent=92 // loop_footer_branch
              %124 = sbr.rel target = $region102
            $region107: #{tpu_custom_call.1} parent=92 // loop_exit
              _
          $region93: #{tpu_custom_call.1} parent=77 // pred_fallthru
            _
        $region78: #{tpu_custom_call.1} parent=73 // pred_fallthru
          _
        // Predicated region
        $region79: #{tpu_custom_call.1} parent=73 // pred_check
          _
        $region80: #{tpu_custom_call.1} parent=73 // pred_check_branch
          %93 = sbr.rel (0) target = $region82
        $region81: #{tpu_custom_call.1} parent=73 // pred_region
          %s95 = ssub.s32 16, 1
          loop: start=0, step=1, limit=1
          $region83: #{tpu_custom_call.1} parent=81 // loop_pre_header
            _
          $region84: #{tpu_custom_call.1} parent=81 // loop_header
            %s97 = sphi 0, %s101
            %p98 = scmp.ge.s32.totalorder %s97, 1
            %s102 = sphi %s87, %s87
            %s103 = sphi [#allocation4], [#allocation4]
          $region85: #{tpu_custom_call.1} parent=81 // loop_header_branch
            %100 = sbr.rel (%p98) target = $region89
          $region86: #{tpu_custom_call.1} parent=81 // loop_body
            %v104 = vld [vmem:[%s102] sm:%s95]
            %105 = vst [vmem:[%s103] sm:%s95] %v104
            %v106 = vld [vmem:[%s102 + $0x8] sm:%s95]
            %107 = vst [vmem:[%s103 + $0x4] sm:%s95] %v106
            %v108 = vld [vmem:[%s102 + $0x10] sm:%s95]
            %109 = vst [vmem:[%s103 + $0x8] sm:%s95] %v108
            %v110 = vld [vmem:[%s102 + $0x18] sm:%s95]
            %111 = vst [vmem:[%s103 + $0xc] sm:%s95] %v110
          $region87: #{tpu_custom_call.1} parent=81 // loop_footer
            %s101 = sadd.s32 1, %s97
          $region88: #{tpu_custom_call.1} parent=81 // loop_footer_branch
            %96 = sbr.rel target = $region84
          $region89: #{tpu_custom_call.1} parent=81 // loop_exit
            _
        $region82: #{tpu_custom_call.1} parent=73 // pred_fallthru
          _
      $region74: #{tpu_custom_call.1} parent=69 // pred_fallthru
        _
      %140 = vnop
    $region70: #{tpu_custom_call.1} parent=1 // pred_fallthru
      _
    // Predicated region
    $region108: #{tpu_custom_call.1} parent=1 // pred_check
      _
    $region109: #{tpu_custom_call.1} parent=1 // pred_check_branch
      %142 = sbr.rel (0) target = $region111
    $region110: #{tpu_custom_call.1} parent=1 // pred_region
      _
    $region111: #{tpu_custom_call.1} parent=1 // pred_fallthru
      _
    // Predicated region
    $region112: #{tpu_custom_call.1} parent=1 // pred_check
      _
    $region113: #{tpu_custom_call.1} parent=1 // pred_check_branch
      %144 = sbr.rel (0) target = $region115
    $region114: #{tpu_custom_call.1} parent=1 // pred_region
      _
    $region115: #{tpu_custom_call.1} parent=1 // pred_fallthru
      _
    %p146 = scmp.eq.s32.totalorder 0, 0
    // Predicated region
    $region116: #{tpu_custom_call.1} parent=1 // pred_check
      %p147 = pneg %p146
    $region117: #{tpu_custom_call.1} parent=1 // pred_check_branch
      %149 = sbr.rel (%p147) target = $region119
    $region118: #{tpu_custom_call.1} parent=1 // pred_region
      %vm150 = vcmask 517120
      %151 = vst.msk [vmem:[#allocation2] sm:$0x3] %vm150, 0.0
    $region119: #{tpu_custom_call.1} parent=1 // pred_fallthru
      _
    %v152 = vld [vmem:[#allocation2] sm:$0x3]
    %v153 = vld [vmem:[%s0] sm:$0x1]
    %v154 = vld [vmem:[%s1] sm:$0xf]
    %v155 = vld [vmem:[%s1 + $0x4] sm:$0xf]
    %v156 = vld [vmem:[%s1 + $0x8] sm:$0xf]
    %v157 = vld [vmem:[%s1 + $0xc] sm:$0xf]
    %v162 = vunpack.c.l.b16 %v154
    %v163 = vunpack.c.l.b16 %v155
    %v164 = vunpack.c.l.b16 %v156
    %v165 = vunpack.c.l.b16 %v157
    %v166 = vpack.c.b16 %v163, %v162
    %v167 = vpack.c.b16 %v165, %v164
    %vm170 = vcmask 261120
    %v172 = vsel %vm170, %v153, 0
    %174 = vmatprep.subr.bf16.mxu0 0
    %175 = vmatpush1.bf16.msra.mxu0 0
    %176 = vmatprep.subr.bf16.mxu0 0
    %177 = vmatpush1.bf16.msra.mxu0 0
    %178 = vmatprep.subr.bf16.mxu0 0
    %179 = vmatpush1.bf16.msra.mxu0 0
    %180 = vmatprep.subr.bf16.mxu0 0
    %181 = vmatpush1.bf16.msra.mxu0 0
    %182 = vmatprep.subr.bf16.mxu0 0
    %183 = vmatpush1.bf16.msra.mxu0 0
    %184 = vmatprep.subr.bf16.mxu0 0
    %185 = vmatpush1.bf16.msra.mxu0 0
    %186 = vmatprep.subr.bf16.mxu0 0
    %187 = vmatpush1.bf16.msra.mxu0 %v167
    %188 = vmatprep.subr.bf16.mxu0 0
    %189 = vmatpush1.bf16.msra.mxu0 %v166
    %190 = vmatprep.subr.bf16.mxu0 0
    %191 = vmatpush2.bf16.msra.mxu0 0
    %192 = vmatprep.subr.bf16.mxu0 0
    %193 = vmatpush2.bf16.msra.mxu0 0
    %194 = vmatprep.subr.bf16.mxu0 0
    %195 = vmatpush2.bf16.msra.mxu0 0
    %196 = vmatprep.subr.bf16.mxu0 0
    %197 = vmatpush2.bf16.msra.mxu0 0
    %198 = vmatprep.subr.bf16.mxu0 0
    %199 = vmatpush2.bf16.msra.mxu0 0
    %200 = vmatprep.subr.bf16.mxu0 0
    %201 = vmatpush2.bf16.msra.mxu0 0
    %202 = vmatprep.subr.bf16.mxu0 0
    %203 = vmatpush2.bf16.msra.mxu0 0
    %204 = vmatprep.subr.bf16.mxu0 0
    %205 = vmatpush2.bf16.msra.mxu0 0
    %206 = vmatprep.mubr.bf16.mxu0 0
    %207 = vmatmul.mubr.bf16.gmra.mxu0 %v172
    %v208 = vpop.f32.mrf.mxu0
    %v209 = vadd.f32 0.0, %v208
    %v210 = vpop.f32.mrf.mxu0
    %v211 = vpop.f32.mrf.mxu0
    %v212 = vpop.f32.mrf.mxu0
    %213 = vdwg.mxu0
    %v214 = vadd.f32 %v152, %v209
    %vm215 = vcmask 517120
    %216 = vst.msk [vmem:[#allocation2] sm:$0x3] %vm215, %v214
    // Predicated region
    $region120: #{tpu_custom_call.1} parent=1 // pred_check
      %p217 = pneg %p146
    $region121: #{tpu_custom_call.1} parent=1 // pred_check_branch
      %219 = sbr.rel (%p217) target = $region123
    $region122: #{tpu_custom_call.1} parent=1 // pred_region
      %v220 = vld [vmem:[#allocation2] sm:$0x3]
      %v221 = vld [vmem:[%s2] sm:$0x1]
      %v222 = vld [vmem:[%s3] sm:$0x1]
      %v223 = vld [vmem:[%s4] sm:$0x1]
      %v224 = vld [vmem:[%s5] sm:$0x1]
      %v226 = vlaneseq
      %v227 = vshrl.u32 %v226, 7
      %v228 = vsub.s32 0, %v227
      %v229 = vrot.slane %v221, %v228
      %v231 = vmul.f32 %v220, %v229
      %v233 = vlaneseq
      %v234 = vshrl.u32 %v233, 7
      %v235 = vsub.s32 0, %v234
      %v236 = vrot.slane %v222, %v235
      %238 = vrot.lane.b32.xlu0 %v236, 16
      %v239 = vpop.permute.xlu0 %238
      %v241 = vmul.f32 %v220, %v239
      %243 = vrot.lane.b32.xlu0 %v241, 112
      %v244 = vpop.permute.xlu0 %243
      %v246 = vsub.f32 %v231, %v244
      %v247 = vmul.f32 %v220, %v236
      %248 = vrot.lane.b32.xlu0 %v229, 16
      %v249 = vpop.permute.xlu0 %248
      %v251 = vmul.f32 %v220, %v249
      %253 = vrot.lane.b32.xlu0 %v251, 112
      %v254 = vpop.permute.xlu0 %253
      %v256 = vadd.f32 %v247, %v254
      %v258 = vlaneseq
      %v259 = vshrl.u32 %v258, 7
      %v260 = vsub.s32 0, %v259
      %v261 = vrot.slane %v223, %v260
      %262 = vrot.lane.b32.xlu0 %v261, 32
      %v263 = vpop.permute.xlu0 %262
      %v265 = vmul.f32 %v220, %v263
      %v267 = vlaneseq
      %v268 = vshrl.u32 %v267, 7
      %v269 = vsub.s32 0, %v268
      %v270 = vrot.slane %v224, %v269
      %271 = vrot.lane.b32.xlu0 %v270, 40
      %v272 = vpop.permute.xlu0 %271
      %v274 = vmul.f32 %v220, %v272
      %276 = vrot.lane.b32.xlu0 %v274, 120
      %v277 = vpop.permute.xlu0 %276
      %v279 = vsub.f32 %v265, %v277
      %280 = vrot.lane.b32.xlu0 %v270, 32
      %v281 = vpop.permute.xlu0 %280
      %v283 = vmul.f32 %v220, %v281
      %284 = vrot.lane.b32.xlu0 %v261, 40
      %v285 = vpop.permute.xlu0 %284
      %v287 = vmul.f32 %v220, %v285
      %289 = vrot.lane.b32.xlu0 %v287, 120
      %v290 = vpop.permute.xlu0 %289
      %v292 = vadd.f32 %v283, %v290
      %294 = vrot.lane.b32.xlu0 %v246, 124
      %v295 = vpop.permute.xlu0 %294
      %297 = vrot.lane.b32.xlu0 %v246, 120
      %v298 = vpop.permute.xlu0 %297
      %300 = vrot.lane.b32.xlu0 %v246, 116
      %v301 = vpop.permute.xlu0 %300
      %v303 = vcombine.low %v246, %v298
      %v305 = vunpack.c.l.s4 1983009808
      %v306 = vunpack.c.0.s8 %v305
      %v307 = vlaneseq
      %v308 = vshrl.u32 %v307, 7
      %v309 = vsub.s32 %v306, %v308
      %v310 = vrot.slane %v303, %v309
      %v311 = vcombine.low %v295, %v301
      %v313 = vunpack.c.l.s4 1983009808
      %v314 = vunpack.c.0.s8 %v313
      %v315 = vlaneseq
      %v316 = vshrl.u32 %v315, 7
      %v317 = vsub.s32 %v314, %v316
      %v318 = vrot.slane %v311, %v317
      %v319 = vcombine.low %v310, %v318
      %v321 = vunpack.c.l.s4 1934713408
      %v322 = vunpack.c.0.s8 %v321
      %v323 = vlaneseq
      %v324 = vshrl.u32 %v323, 7
      %v325 = vsub.s32 %v322, %v324
      %v326 = vrot.slane %v319, %v325
      %v327 = vcombine.high %v326, 0.0
      %329 = vrot.lane.b32.xlu0 %v256, 124
      %v330 = vpop.permute.xlu0 %329
      %332 = vrot.lane.b32.xlu0 %v256, 120
      %v333 = vpop.permute.xlu0 %332
      %335 = vrot.lane.b32.xlu0 %v256, 116
      %v336 = vpop.permute.xlu0 %335
      %v338 = vcombine.low %v256, %v333
      %v340 = vunpack.c.l.s4 1983009808
      %v341 = vunpack.c.0.s8 %v340
      %v342 = vlaneseq
      %v343 = vshrl.u32 %v342, 7
      %v344 = vsub.s32 %v341, %v343
      %v345 = vrot.slane %v338, %v344
      %v346 = vcombine.low %v330, %v336
      %v348 = vunpack.c.l.s4 1983009808
      %v349 = vunpack.c.0.s8 %v348
      %v350 = vlaneseq
      %v351 = vshrl.u32 %v350, 7
      %v352 = vsub.s32 %v349, %v351
      %v353 = vrot.slane %v346, %v352
      %v354 = vcombine.low %v345, %v353
      %v356 = vunpack.c.l.s4 1934713408
      %v357 = vunpack.c.0.s8 %v356
      %v358 = vlaneseq
      %v359 = vshrl.u32 %v358, 7
      %v360 = vsub.s32 %v357, %v359
      %v361 = vrot.slane %v354, %v360
      %v362 = vcombine.high %v361, 0.0
      %365 = vrot.lane.b32.xlu0 %v361, 4
      %v366 = vpop.permute.xlu0 %365
      %367 = vrot.lane.b32.xlu0 %v362, 4
      %v368 = vpop.permute.xlu0 %367
      %vm371 = vcmask 31744
      %v372 = vsel %vm371, %v326, %v366
      %v373 = vsel %vm371, %v327, %v368
      %v374 = vpack.c.bf16 %v372, %v372
      %v375 = vpack.c.bf16 %v373, %v373
      %vm376 = vcmask 58368
      %377 = vst.msk [vmem:[#allocation5] sm:$0x3] %vm376, %v374
      %378 = vst.msk [vmem:[#allocation5 + $0x2] sm:$0x3] %vm376, %v375
      %380 = vrot.lane.b32.xlu0 %v279, 124
      %v381 = vpop.permute.xlu0 %380
      %382 = vrot.lane.b32.xlu0 %v279, 96
      %v383 = vpop.permute.xlu0 %382
      %384 = vrot.lane.b32.xlu0 %v381, 96
      %v385 = vpop.permute.xlu0 %384
      %v388 = vcombine.low %v383, %v385
      %v390 = vunpack.c.l.s4 1934713408
      %v391 = vunpack.c.0.s8 %v390
      %v392 = vlaneseq
      %v393 = vshrl.u32 %v392, 7
      %v394 = vsub.s32 %v391, %v393
      %v395 = vrot.slane %v388, %v394
      %v396 = vcombine.high %v395, 0.0
      %398 = vrot.lane.b32.xlu0 %v292, 124
      %v399 = vpop.permute.xlu0 %398
      %400 = vrot.lane.b32.xlu0 %v292, 96
      %v401 = vpop.permute.xlu0 %400
      %402 = vrot.lane.b32.xlu0 %v399, 96
      %v403 = vpop.permute.xlu0 %402
      %v406 = vcombine.low %v401, %v403
      %v408 = vunpack.c.l.s4 1934713408
      %v409 = vunpack.c.0.s8 %v408
      %v410 = vlaneseq
      %v411 = vshrl.u32 %v410, 7
      %v412 = vsub.s32 %v409, %v411
      %v413 = vrot.slane %v406, %v412
      %v414 = vcombine.high %v413, 0.0
      %417 = vrot.lane.b32.xlu0 %v413, 4
      %v418 = vpop.permute.xlu0 %417
      %419 = vrot.lane.b32.xlu0 %v414, 4
      %v420 = vpop.permute.xlu0 %419
      %v423 = vsel %vm371, %v395, %v418
      %v424 = vsel %vm371, %v396, %v420
      %426 = vrot.lane.b32.xlu0 %v220, 120
      %v427 = vpop.permute.xlu0 %426
      %428 = vrot.lane.b32.xlu0 %v220, 80
      %v429 = vpop.permute.xlu0 %428
      %430 = vrot.lane.b32.xlu0 %v427, 80
      %v431 = vpop.permute.xlu0 %430
      %v434 = vcombine.low %v429, %v431
      %v436 = vunpack.c.l.s4 1934713408
      %v437 = vunpack.c.0.s8 %v436
      %v438 = vlaneseq
      %v439 = vshrl.u32 %v438, 7
      %v440 = vsub.s32 %v437, %v439
      %v441 = vrot.slane %v434, %v440
      %v442 = vcombine.high %v441, 0.0
      %v443 = vld [vmem:[#allocation3] sm:$0xf]
      %v444 = vld [vmem:[#allocation3 + $0x4] sm:$0xf]
      %v445 = vld [vmem:[#allocation3 + $0x8] sm:$0xf]
      %v446 = vld [vmem:[#allocation3 + $0xc] sm:$0xf]
      %vm447 = vcmask 60416
      %448 = vst.msk [vmem:[#allocation7] sm:$0xf] %vm447, %v443
      %449 = vst.msk [vmem:[#allocation7 + $0x4] sm:$0xf] %vm447, %v444
      %450 = vst.msk [vmem:[#allocation7 + $0x8] sm:$0xf] %vm447, %v445
      %451 = vst.msk [vmem:[#allocation7 + $0xc] sm:$0xf] %vm447, %v446
      %v452 = vld [vmem:[#allocation4] sm:$0xf]
      %v453 = vld [vmem:[#allocation4 + $0x4] sm:$0xf]
      %v454 = vld [vmem:[#allocation4 + $0x8] sm:$0xf]
      %v455 = vld [vmem:[#allocation4 + $0xc] sm:$0xf]
      %456 = vst.msk [vmem:[#allocation8] sm:$0xf] %vm447, %v452
      %457 = vst.msk [vmem:[#allocation8 + $0x4] sm:$0xf] %vm447, %v453
      %458 = vst.msk [vmem:[#allocation8 + $0x8] sm:$0xf] %vm447, %v454
      %459 = vst.msk [vmem:[#allocation8 + $0xc] sm:$0xf] %vm447, %v455
      %v460 = vpack.c.bf16 %v423, %v423
      %v461 = vpack.c.bf16 %v424, %v424
      %v465 = vunpack.c.l.s4 1966171168
      %v466 = vunpack.c.0.s8 %v465
      %v467 = vlaneseq
      %v468 = vshrl.u32 %v467, 7
      %v469 = vsub.s32 %v466, %v468
      %v470 = vrot.slane %v460, %v469
      %v472 = vunpack.c.l.s4 1966171168
      %v473 = vunpack.c.0.s8 %v472
      %v474 = vlaneseq
      %v475 = vshrl.u32 %v474, 7
      %v476 = vsub.s32 %v473, %v475
      %v477 = vrot.slane %v470, %v476
      %v479 = vunpack.c.l.s4 1966171168
      %v480 = vunpack.c.0.s8 %v479
      %v481 = vlaneseq
      %v482 = vshrl.u32 %v481, 7
      %v483 = vsub.s32 %v480, %v482
      %v484 = vrot.slane %v461, %v483
      %v486 = vunpack.c.l.s4 1966171168
      %v487 = vunpack.c.0.s8 %v486
      %v488 = vlaneseq
      %v489 = vshrl.u32 %v488, 7
      %v490 = vsub.s32 %v487, %v489
      %v491 = vrot.slane %v484, %v490
      %v492 = vunpack.i.l.s16 %v477
      %v493 = vunpack.i.h.s16 %v477
      %v494 = vunpack.i.l.s16 %v491
      %v495 = vunpack.i.h.s16 %v491
      %v496 = vpack.i.b16 %v492, %v492
      %v497 = vpack.i.b16 %v493, %v493
      %v498 = vpack.i.b16 %v494, %v494
      %v499 = vpack.i.b16 %v495, %v495
      %v501 = vunpack.c.l.s4 286326784
      %v502 = vunpack.c.0.s8 %v501
      %v503 = vlaneseq
      %v504 = vshrl.u32 %v503, 7
      %v505 = vsub.s32 %v502, %v504
      %v506 = vrot.slane %v496, %v505
      %v508 = vunpack.c.l.s4 286326784
      %v509 = vunpack.c.0.s8 %v508
      %v510 = vlaneseq
      %v511 = vshrl.u32 %v510, 7
      %v512 = vsub.s32 %v509, %v511
      %v513 = vrot.slane %v497, %v512
      %v515 = vunpack.c.l.s4 286326784
      %v516 = vunpack.c.0.s8 %v515
      %v517 = vlaneseq
      %v518 = vshrl.u32 %v517, 7
      %v519 = vsub.s32 %v516, %v518
      %v520 = vrot.slane %v498, %v519
      %v522 = vunpack.c.l.s4 286326784
      %v523 = vunpack.c.0.s8 %v522
      %v524 = vlaneseq
      %v525 = vshrl.u32 %v524, 7
      %v526 = vsub.s32 %v523, %v525
      %v527 = vrot.slane %v499, %v526
      %vm532 = vcmask 58369
      %vm533 = vsmask.f32 7942
      %vm534 = vmand %vm532, %vm533
      %v535 = vld [vmem:[#allocation7] sm:$0x2]
      %v536 = vsel %vm534, %v506, %v535
      %537 = vst [vmem:[#allocation7] sm:$0x2] %v536
      %v538 = vld [vmem:[#allocation7 + $0x4] sm:$0x2]
      %v539 = vsel %vm534, %v513, %v538
      %540 = vst [vmem:[#allocation7 + $0x4] sm:$0x2] %v539
      %v541 = vld [vmem:[#allocation7 + $0x8] sm:$0x2]
      %v542 = vsel %vm534, %v520, %v541
      %543 = vst [vmem:[#allocation7 + $0x8] sm:$0x2] %v542
      %v544 = vld [vmem:[#allocation7 + $0xc] sm:$0x2]
      %v545 = vsel %vm534, %v527, %v544
      %546 = vst [vmem:[#allocation7 + $0xc] sm:$0x2] %v545
      %v547 = vpack.c.bf16 %v441, %v441
      %v548 = vpack.c.bf16 %v442, %v442
      %v552 = vunpack.c.l.s4 1966171168
      %v553 = vunpack.c.0.s8 %v552
      %v554 = vlaneseq
      %v555 = vshrl.u32 %v554, 7
      %v556 = vsub.s32 %v553, %v555
      %v557 = vrot.slane %v547, %v556
      %v559 = vunpack.c.l.s4 1966171168
      %v560 = vunpack.c.0.s8 %v559
      %v561 = vlaneseq
      %v562 = vshrl.u32 %v561, 7
      %v563 = vsub.s32 %v560, %v562
      %v564 = vrot.slane %v557, %v563
      %v566 = vunpack.c.l.s4 1966171168
      %v567 = vunpack.c.0.s8 %v566
      %v568 = vlaneseq
      %v569 = vshrl.u32 %v568, 7
      %v570 = vsub.s32 %v567, %v569
      %v571 = vrot.slane %v548, %v570
      %v573 = vunpack.c.l.s4 1966171168
      %v574 = vunpack.c.0.s8 %v573
      %v575 = vlaneseq
      %v576 = vshrl.u32 %v575, 7
      %v577 = vsub.s32 %v574, %v576
      %v578 = vrot.slane %v571, %v577
      %v579 = vunpack.i.l.s16 %v564
      %v580 = vunpack.i.h.s16 %v564
      %v581 = vunpack.i.l.s16 %v578
      %v582 = vunpack.i.h.s16 %v578
      %v583 = vpack.i.b16 %v579, %v579
      %v584 = vpack.i.b16 %v580, %v580
      %v585 = vpack.i.b16 %v581, %v581
      %v586 = vpack.i.b16 %v582, %v582
      %v588 = vunpack.c.l.s4 286326784
      %v589 = vunpack.c.0.s8 %v588
      %v590 = vlaneseq
      %v591 = vshrl.u32 %v590, 7
      %v592 = vsub.s32 %v589, %v591
      %v593 = vrot.slane %v583, %v592
      %v595 = vunpack.c.l.s4 286326784
      %v596 = vunpack.c.0.s8 %v595
      %v597 = vlaneseq
      %v598 = vshrl.u32 %v597, 7
      %v599 = vsub.s32 %v596, %v598
      %v600 = vrot.slane %v584, %v599
      %v602 = vunpack.c.l.s4 286326784
      %v603 = vunpack.c.0.s8 %v602
      %v604 = vlaneseq
      %v605 = vshrl.u32 %v604, 7
      %v606 = vsub.s32 %v603, %v605
      %v607 = vrot.slane %v585, %v606
      %v609 = vunpack.c.l.s4 286326784
      %v610 = vunpack.c.0.s8 %v609
      %v611 = vlaneseq
      %v612 = vshrl.u32 %v611, 7
      %v613 = vsub.s32 %v610, %v612
      %v614 = vrot.slane %v586, %v613
      %v619 = vld [vmem:[#allocation8] sm:$0x2]
      %v620 = vsel %vm534, %v593, %v619
      %621 = vst [vmem:[#allocation8] sm:$0x2] %v620
      %v622 = vld [vmem:[#allocation8 + $0x4] sm:$0x2]
      %v623 = vsel %vm534, %v600, %v622
      %624 = vst [vmem:[#allocation8 + $0x4] sm:$0x2] %v623
      %v625 = vld [vmem:[#allocation8 + $0x8] sm:$0x2]
      %v626 = vsel %vm534, %v607, %v625
      %627 = vst [vmem:[#allocation8 + $0x8] sm:$0x2] %v626
      %v628 = vld [vmem:[#allocation8 + $0xc] sm:$0x2]
      %v629 = vsel %vm534, %v614, %v628
      %630 = vst [vmem:[#allocation8 + $0xc] sm:$0x2] %v629
    $region123: #{tpu_custom_call.1} parent=1 // pred_fallthru
      _
    // Predicated region
    $region124: #{tpu_custom_call.1} parent=1 // pred_check
      _
    $region125: #{tpu_custom_call.1} parent=1 // pred_check_branch
      %632 = sbr.rel (0) target = $region127
    $region126: #{tpu_custom_call.1} parent=1 // pred_region
      %s634 = ssub.s32 64, 64
      %635 = vsyncadd [#allocation6], %s634
      %s636 = sshll.u32 [#allocation5], 4
      %s637 = int_to_ptr.vmem [resolvable:$true] %s636
      %642 = dma.vmem_to_hbm [thread:$0]  %s637, 64, %s8, [#allocation6], 32, 32, 2
    $region127: #{tpu_custom_call.1} parent=1 // pred_fallthru
      _
    // Predicated region
    $region128: #{tpu_custom_call.1} parent=1 // pred_check
      _
    $region129: #{tpu_custom_call.1} parent=1 // pred_check_branch
      %644 = sbr.rel (0) target = $region131
    $region130: #{tpu_custom_call.1} parent=1 // pred_region
      %s645 = scalar_lea.vmem %s9, 4
      // Predicated region
      $region132: #{tpu_custom_call.1} parent=130 // pred_check
        _
      $region133: #{tpu_custom_call.1} parent=130 // pred_check_branch
        %647 = sbr.rel (0) target = $region135
      $region134: #{tpu_custom_call.1} parent=130 // pred_region
        // Predicated region
        $region136: #{tpu_custom_call.1} parent=134 // pred_check
          _
        $region137: #{tpu_custom_call.1} parent=134 // pred_check_branch
          %649 = sbr.rel target = $region139
        $region138: #{tpu_custom_call.1} parent=134 // pred_region
          // Predicated region
          $region151: #{tpu_custom_call.1} parent=138 // pred_check
            _
          $region152: #{tpu_custom_call.1} parent=138 // pred_check_branch
            %671 = sbr.rel (0) target = $region154
          $region153: #{tpu_custom_call.1} parent=138 // pred_region
            loop: start=0, step=1, limit=1
            $region155: #{tpu_custom_call.1} parent=153 // loop_pre_header
              _
            $region156: #{tpu_custom_call.1} parent=153 // loop_header
              %s673 = sphi 0, %s677
              %p674 = scmp.ge.s32.totalorder %s673, 1
              %s678 = sphi [#allocation7], [#allocation7]
              %s679 = sphi %s645, %s645
            $region157: #{tpu_custom_call.1} parent=153 // loop_header_branch
              %676 = sbr.rel (%p674) target = $region161
            $region158: #{tpu_custom_call.1} parent=153 // loop_body
              _
            $region159: #{tpu_custom_call.1} parent=153 // loop_footer
              %s677 = sadd.s32 1, %s673
            $region160: #{tpu_custom_call.1} parent=153 // loop_footer_branch
              %672 = sbr.rel target = $region156
            $region161: #{tpu_custom_call.1} parent=153 // loop_exit
              _
            %s681 = ssub.s32 16, 1
            loop: start=0, step=1, limit=1
            $region162: #{tpu_custom_call.1} parent=153 // loop_pre_header
              _
            $region163: #{tpu_custom_call.1} parent=153 // loop_header
              %s683 = sphi 0, %s687
              %p684 = scmp.ge.s32.totalorder %s683, 1
              %s688 = sphi [#allocation7], [#allocation7]
              %s689 = sphi %s645, %s645
            $region164: #{tpu_custom_call.1} parent=153 // loop_header_branch
              %686 = sbr.rel (%p684) target = $region168
            $region165: #{tpu_custom_call.1} parent=153 // loop_body
              %v690 = vld [vmem:[%s688] sm:%s681]
              %691 = vst [vmem:[%s689] sm:%s681] %v690
              %v692 = vld [vmem:[%s688 + $0x4] sm:%s681]
              %693 = vst [vmem:[%s689 + $0x8] sm:%s681] %v692
              %v694 = vld [vmem:[%s688 + $0x8] sm:%s681]
              %695 = vst [vmem:[%s689 + $0x10] sm:%s681] %v694
              %v696 = vld [vmem:[%s688 + $0xc] sm:%s681]
              %697 = vst [vmem:[%s689 + $0x18] sm:%s681] %v696
            $region166: #{tpu_custom_call.1} parent=153 // loop_footer
              %s687 = sadd.s32 1, %s683
            $region167: #{tpu_custom_call.1} parent=153 // loop_footer_branch
              %682 = sbr.rel target = $region163
            $region168: #{tpu_custom_call.1} parent=153 // loop_exit
              _
          $region154: #{tpu_custom_call.1} parent=138 // pred_fallthru
            _
        $region139: #{tpu_custom_call.1} parent=134 // pred_fallthru
          _
        // Predicated region
        $region140: #{tpu_custom_call.1} parent=134 // pred_check
          _
        $region141: #{tpu_custom_call.1} parent=134 // pred_check_branch
          %651 = sbr.rel (0) target = $region143
        $region142: #{tpu_custom_call.1} parent=134 // pred_region
          %s653 = ssub.s32 16, 1
          loop: start=0, step=1, limit=1
          $region144: #{tpu_custom_call.1} parent=142 // loop_pre_header
            _
          $region145: #{tpu_custom_call.1} parent=142 // loop_header
            %s655 = sphi 0, %s659
            %p656 = scmp.ge.s32.totalorder %s655, 1
            %s660 = sphi [#allocation7], [#allocation7]
            %s661 = sphi %s645, %s645
          $region146: #{tpu_custom_call.1} parent=142 // loop_header_branch
            %658 = sbr.rel (%p656) target = $region150
          $region147: #{tpu_custom_call.1} parent=142 // loop_body
            %v662 = vld [vmem:[%s660] sm:%s653]
            %663 = vst [vmem:[%s661] sm:%s653] %v662
            %v664 = vld [vmem:[%s660 + $0x4] sm:%s653]
            %665 = vst [vmem:[%s661 + $0x8] sm:%s653] %v664
            %v666 = vld [vmem:[%s660 + $0x8] sm:%s653]
            %667 = vst [vmem:[%s661 + $0x10] sm:%s653] %v666
            %v668 = vld [vmem:[%s660 + $0xc] sm:%s653]
            %669 = vst [vmem:[%s661 + $0x18] sm:%s653] %v668
          $region148: #{tpu_custom_call.1} parent=142 // loop_footer
            %s659 = sadd.s32 1, %s655
          $region149: #{tpu_custom_call.1} parent=142 // loop_footer_branch
            %654 = sbr.rel target = $region145
          $region150: #{tpu_custom_call.1} parent=142 // loop_exit
            _
        $region143: #{tpu_custom_call.1} parent=134 // pred_fallthru
          _
      $region135: #{tpu_custom_call.1} parent=130 // pred_fallthru
        _
      %698 = vnop
    $region131: #{tpu_custom_call.1} parent=1 // pred_fallthru
      _
    // Predicated region
    $region169: #{tpu_custom_call.1} parent=1 // pred_check
      _
    $region170: #{tpu_custom_call.1} parent=1 // pred_check_branch
      %700 = sbr.rel (0) target = $region172
    $region171: #{tpu_custom_call.1} parent=1 // pred_region
      %s701 = scalar_lea.vmem %s10, 4
      // Predicated region
      $region173: #{tpu_custom_call.1} parent=171 // pred_check
        _
      $region174: #{tpu_custom_call.1} parent=171 // pred_check_branch
        %703 = sbr.rel (0) target = $region176
      $region175: #{tpu_custom_call.1} parent=171 // pred_region
        // Predicated region
        $region177: #{tpu_custom_call.1} parent=175 // pred_check
          _
        $region178: #{tpu_custom_call.1} parent=175 // pred_check_branch
          %705 = sbr.rel target = $region180
        $region179: #{tpu_custom_call.1} parent=175 // pred_region
          // Predicated region
          $region192: #{tpu_custom_call.1} parent=179 // pred_check
            _
          $region193: #{tpu_custom_call.1} parent=179 // pred_check_branch
            %727 = sbr.rel (0) target = $region195
          $region194: #{tpu_custom_call.1} parent=179 // pred_region
            loop: start=0, step=1, limit=1
            $region196: #{tpu_custom_call.1} parent=194 // loop_pre_header
              _
            $region197: #{tpu_custom_call.1} parent=194 // loop_header
              %s729 = sphi 0, %s733
              %p730 = scmp.ge.s32.totalorder %s729, 1
              %s734 = sphi [#allocation8], [#allocation8]
              %s735 = sphi %s701, %s701
            $region198: #{tpu_custom_call.1} parent=194 // loop_header_branch
              %732 = sbr.rel (%p730) target = $region202
            $region199: #{tpu_custom_call.1} parent=194 // loop_body
              _
            $region200: #{tpu_custom_call.1} parent=194 // loop_footer
              %s733 = sadd.s32 1, %s729
            $region201: #{tpu_custom_call.1} parent=194 // loop_footer_branch
              %728 = sbr.rel target = $region197
            $region202: #{tpu_custom_call.1} parent=194 // loop_exit
              _
            %s737 = ssub.s32 16, 1
            loop: start=0, step=1, limit=1
            $region203: #{tpu_custom_call.1} parent=194 // loop_pre_header
              _
            $region204: #{tpu_custom_call.1} parent=194 // loop_header
              %s739 = sphi 0, %s743
              %p740 = scmp.ge.s32.totalorder %s739, 1
              %s744 = sphi [#allocation8], [#allocation8]
              %s745 = sphi %s701, %s701
            $region205: #{tpu_custom_call.1} parent=194 // loop_header_branch
              %742 = sbr.rel (%p740) target = $region209
            $region206: #{tpu_custom_call.1} parent=194 // loop_body
              %v746 = vld [vmem:[%s744] sm:%s737]
              %747 = vst [vmem:[%s745] sm:%s737] %v746
              %v748 = vld [vmem:[%s744 + $0x4] sm:%s737]
              %749 = vst [vmem:[%s745 + $0x8] sm:%s737] %v748
              %v750 = vld [vmem:[%s744 + $0x8] sm:%s737]
              %751 = vst [vmem:[%s745 + $0x10] sm:%s737] %v750
              %v752 = vld [vmem:[%s744 + $0xc] sm:%s737]
              %753 = vst [vmem:[%s745 + $0x18] sm:%s737] %v752
            $region207: #{tpu_custom_call.1} parent=194 // loop_footer
              %s743 = sadd.s32 1, %s739
            $region208: #{tpu_custom_call.1} parent=194 // loop_footer_branch
              %738 = sbr.rel target = $region204
            $region209: #{tpu_custom_call.1} parent=194 // loop_exit
              _
          $region195: #{tpu_custom_call.1} parent=179 // pred_fallthru
            _
        $region180: #{tpu_custom_call.1} parent=175 // pred_fallthru
          _
        // Predicated region
        $region181: #{tpu_custom_call.1} parent=175 // pred_check
          _
        $region182: #{tpu_custom_call.1} parent=175 // pred_check_branch
          %707 = sbr.rel (0) target = $region184
        $region183: #{tpu_custom_call.1} parent=175 // pred_region
          %s709 = ssub.s32 16, 1
          loop: start=0, step=1, limit=1
          $region185: #{tpu_custom_call.1} parent=183 // loop_pre_header
            _
          $region186: #{tpu_custom_call.1} parent=183 // loop_header
            %s711 = sphi 0, %s715
            %p712 = scmp.ge.s32.totalorder %s711, 1
            %s716 = sphi [#allocation8], [#allocation8]
            %s717 = sphi %s701, %s701
          $region187: #{tpu_custom_call.1} parent=183 // loop_header_branch
            %714 = sbr.rel (%p712) target = $region191
          $region188: #{tpu_custom_call.1} parent=183 // loop_body
            %v718 = vld [vmem:[%s716] sm:%s709]
            %719 = vst [vmem:[%s717] sm:%s709] %v718
            %v720 = vld [vmem:[%s716 + $0x4] sm:%s709]
            %721 = vst [vmem:[%s717 + $0x8] sm:%s709] %v720
            %v722 = vld [vmem:[%s716 + $0x8] sm:%s709]
            %723 = vst [vmem:[%s717 + $0x10] sm:%s709] %v722
            %v724 = vld [vmem:[%s716 + $0xc] sm:%s709]
            %725 = vst [vmem:[%s717 + $0x18] sm:%s709] %v724
          $region189: #{tpu_custom_call.1} parent=183 // loop_footer
            %s715 = sadd.s32 1, %s711
          $region190: #{tpu_custom_call.1} parent=183 // loop_footer_branch
            %710 = sbr.rel target = $region186
          $region191: #{tpu_custom_call.1} parent=183 // loop_exit
            _
        $region184: #{tpu_custom_call.1} parent=175 // pred_fallthru
          _
      $region176: #{tpu_custom_call.1} parent=171 // pred_fallthru
        _
      %754 = vnop
    $region172: #{tpu_custom_call.1} parent=1 // pred_fallthru
      _
    // Predicated region
    $region210: #{tpu_custom_call.1} parent=1 // pred_check
      _
    $region211: #{tpu_custom_call.1} parent=1 // pred_check_branch
      %756 = sbr.rel (0) target = $region213
    $region212: #{tpu_custom_call.1} parent=1 // pred_region
      %757 = dma.done [#allocation6], 64
    $region213: #{tpu_custom_call.1} parent=1 // pred_fallthru
      _
    // Predicated region
    $region214: #{tpu_custom_call.1} parent=1 // pred_check
      _
    $region215: #{tpu_custom_call.1} parent=1 // pred_check_branch
      %759 = sbr.rel (0) target = $region217
    $region216: #{tpu_custom_call.1} parent=1 // pred_region
      _
    $region217: #{tpu_custom_call.1} parent=1 // pred_fallthru
      _
    // Predicated region
    $region218: #{tpu_custom_call.1} parent=1 // pred_check
      _
    $region219: #{tpu_custom_call.1} parent=1 // pred_check_branch
      %761 = sbr.rel (0) target = $region221
    $region220: #{tpu_custom_call.1} parent=1 // pred_region
      _
    $region221: #{tpu_custom_call.1} parent=1 // pred_fallthru
      _
    %762 = vsyncpa [#allocation6], 1

</llo_original>
